<compile_context>
chip_gen: v5e
topology: v5e:2x2
jax: 0.10.0
libtpu: 0.0.40
codegen_flags: <defaults>
</compile_context>

<pallas_src>
import jax
import jax.numpy as jnp
from jax.experimental import pallas as pl
from jax.experimental.pallas import tpu as pltpu


def _round_up(x, m):
    return ((x + m - 1) // m) * m


def _linear_kernel(x_ref, w_ref, b_ref, o_ref):
    # x_ref : (tm, tk) VMEM  input tile
    # w_ref : (tk, tn) VMEM  weight tile, already in (K, N) layout
    # b_ref : (1,  tn) VMEM  bias tile
    # o_ref : (tm, tn) VMEM  output tile == accumulator (resident across K steps)
    k = pl.program_id(2)

    @pl.when(k == 0)
    def _():
        # Fold the bias add into the accumulator init (free).
        o_ref[...] = jnp.broadcast_to(b_ref[...], o_ref.shape).astype(o_ref.dtype)

    acc = jnp.dot(x_ref[...], w_ref[...], preferred_element_type=jnp.float32)
    o_ref[...] = (o_ref[...] + acc).astype(o_ref.dtype)


def linear_forward(x, weight, bias=None, *, tm=512, tn=512, tk=1024):
    """output = x @ weight.T + bias   (PyTorch _linear / LinearFunction forward)."""
    M, K = x.shape
    N, K2 = weight.shape
    assert K == K2, "in_features mismatch"
    if bias is None:
        bias = jnp.zeros((N,), dtype=x.dtype)

    # Clamp tiles. For small M keep the whole (8-aligned) batch resident so the
    # weight streams from HBM exactly once; keep N/K lane-aligned (128).
    tm = min(tm, _round_up(M, 8))
    tn = min(tn, _round_up(N, 128))
    tk = min(tk, _round_up(K, 128))

    Mp = _round_up(M, tm)
    Np = _round_up(N, tn)
    Kp = _round_up(K, tk)

    # One-time (K, N) weight layout (fused with the K/N zero-pad): canonical MXU
    # contraction in the kernel, no per-step transposes. Zero K-padding keeps
    # the reduction exact; padded M rows / N cols are sliced off at the end.
    w_kn = weight.T
    x_p = x if (Mp, Kp) == (M, K) else jnp.pad(x, ((0, Mp - M), (0, Kp - K)))
    w_p = w_kn if (Kp, Np) == (K, N) else jnp.pad(w_kn, ((0, Kp - K), (0, Np - N)))
    b_p = bias if Np == N else jnp.pad(bias, (0, Np - N))
    b2d = b_p.reshape(1, Np)

    grid = (Mp // tm, Np // tn, Kp // tk)

    out_p = pl.pallas_call(
        _linear_kernel,
        out_shape=jax.ShapeDtypeStruct((Mp, Np), x.dtype),
        grid_spec=pltpu.PrefetchScalarGridSpec(
            num_scalar_prefetch=0,
            grid=grid,
            in_specs=[
                pl.BlockSpec((tm, tk), lambda i, j, k: (i, k)),   # input  (M, K)
                pl.BlockSpec((tk, tn), lambda i, j, k: (k, j)),   # weight (K, N)
                pl.BlockSpec((1, tn), lambda i, j, k: (0, j)),    # bias   (1, N)
            ],
            out_specs=pl.BlockSpec((tm, tn), lambda i, j, k: (i, j)),
        ),
        compiler_params=pltpu.CompilerParams(
            dimension_semantics=("parallel", "parallel", "arbitrary"),
            # > v5e's 16 MiB scoped default, comfortably < v7x's 64 MiB VMEM.
            vmem_limit_bytes=40 * 1024 * 1024,
        ),
    )(x_p, w_p, b2d)

    if (Mp, Np) != (M, N):
        out_p = out_p[:M, :N]
    return out_p


if __name__ == "__main__":
    key = jax.random.PRNGKey(0)

    # --- Test 1: tiny shapes matching the module demo (whole-M-resident path) ---
    M, K, N = 8, 32, 64
    kx, kw, kb, key = jax.random.split(key, 4)
    x = jax.random.normal(kx, (M, K), dtype=jnp.float32)
    weight = jax.random.uniform(kw, (N, K), minval=-0.1, maxval=0.1,
                                dtype=jnp.float32)
    bias = jax.random.uniform(kb, (N,), minval=-0.1, maxval=0.1,
                              dtype=jnp.float32)
    out = jax.block_until_ready(linear_forward(x, weight, bias))
    ref = x @ weight.T + bias[None, :]
    assert out.shape == (M, N)
    assert jnp.allclose(out, ref, atol=1e-5, rtol=1e-5), "mismatch (tiny)"

    # --- Test 2: non-aligned shapes exercising a multi-step M/N/K grid ---
    M2, K2, N2 = 48, 300, 200
    kx2, kw2, kb2, key = jax.random.split(key, 4)
    x2 = jax.random.normal(kx2, (M2, K2), dtype=jnp.float32)
    w2 = jax.random.uniform(kw2, (N2, K2), minval=-0.1, maxval=0.1,
                            dtype=jnp.float32)
    b2 = jax.random.uniform(kb2, (N2,), minval=-0.1, maxval=0.1,
                            dtype=jnp.float32)
    out2 = jax.block_until_ready(
        linear_forward(x2, w2, b2, tm=16, tn=128, tk=128))
    ref2 = x2 @ w2.T + b2[None, :]
    assert out2.shape == (M2, N2)
    assert jnp.allclose(out2, ref2, atol=1e-4, rtol=1e-4), "mismatch (tiled)"

    # --- Test 3: no-bias path ---
    out3 = jax.block_until_ready(linear_forward(x2, w2, None, tm=16, tn=128, tk=128))
    ref3 = x2 @ w2.T
    assert jnp.allclose(out3, ref3, atol=1e-4, rtol=1e-4), "mismatch (no bias)"

    print("KERNEL_OK")
</pallas_src>

<mosaic_0001>
module attributes {stable_mosaic.version = 11 : i64} {
  func.func @_linear_kernel(%arg0: i32, %arg1: i32, %arg2: i32, %arg3: memref<8x128xf32, #tpu.memory_space<vmem>>, %arg4: memref<128x128xf32, #tpu.memory_space<vmem>>, %arg5: memref<1x128xf32, #tpu.memory_space<vmem>>, %arg6: memref<8x128xf32, #tpu.memory_space<vmem>>) attributes {dimension_semantics = [#tpu.dimension_semantics<parallel>, #tpu.dimension_semantics<parallel>, #tpu.dimension_semantics<arbitrary>], iteration_bounds = array<i64: 1, 1, 1>, scalar_prefetch = 0 : i64, scratch_operands = 0 : i64, tpu.core_type = #tpu.core_type<tc>, window_params = [{transform_indices = @transform_0, window_bounds = array<i64: 8, 128>}, {transform_indices = @transform_1, window_bounds = array<i64: 128, 128>}, {transform_indices = @transform_2, window_bounds = array<i64: 1, 128>}, {transform_indices = @transform_3, window_bounds = array<i64: 8, 128>}]} {
    %c0_i32 = arith.constant 0 : i32
    %0 = arith.cmpi eq, %arg2, %c0_i32 : i32
    %1 = arith.extui %0 : i1 to i32
    %c0_i32_0 = arith.constant 0 : i32
    %2 = arith.cmpi ne, %1, %c0_i32_0 : i32
    scf.if %2 {
      %c0_8 = arith.constant 0 : index
      %c0_9 = arith.constant 0 : index
      %9 = vector.load %arg5[%c0_8, %c0_9] : memref<1x128xf32, #tpu.memory_space<vmem>>, vector<1x128xf32>
      %10 = vector.shape_cast %9 : vector<1x128xf32> to vector<1x128xf32>
      %11 = vector.broadcast %10 : vector<1x128xf32> to vector<8x128xf32>
      %c0_10 = arith.constant 0 : index
      %c0_11 = arith.constant 0 : index
      %12 = vector.load %arg6[%c0_10, %c0_11] : memref<8x128xf32, #tpu.memory_space<vmem>>, vector<8x128xf32>
      tpu.vector_store %arg6[%c0_10, %c0_11], %11 {strides = array<i32>} : memref<8x128xf32, #tpu.memory_space<vmem>>, vector<8x128xf32>,
    } else {
    }
    %c0 = arith.constant 0 : index
    %c0_1 = arith.constant 0 : index
    %3 = vector.load %arg3[%c0, %c0_1] : memref<8x128xf32, #tpu.memory_space<vmem>>, vector<8x128xf32>
    %c0_2 = arith.constant 0 : index
    %c0_3 = arith.constant 0 : index
    %4 = vector.load %arg4[%c0_2, %c0_3] : memref<128x128xf32, #tpu.memory_space<vmem>>, vector<128x128xf32>
    %cst = arith.constant dense<0.000000e+00> : vector<8x128xf32>
    %5 = tpu.matmul %3, %4, %cst {dimension_numbers = #tpu.dot_dimension_numbers<[1], [0], [0], [1], [0, 0, 1, 1], [], []>} : vector<8x128xf32>, vector<128x128xf32>, vector<8x128xf32> -> vector<8x128xf32>
    %c0_4 = arith.constant 0 : index
    %c0_5 = arith.constant 0 : index
    %6 = vector.load %arg6[%c0_4, %c0_5] : memref<8x128xf32, #tpu.memory_space<vmem>>, vector<8x128xf32>
    %7 = arith.addf %6, %5 : vector<8x128xf32>
    %c0_6 = arith.constant 0 : index
    %c0_7 = arith.constant 0 : index
    %8 = vector.load %arg6[%c0_6, %c0_7] : memref<8x128xf32, #tpu.memory_space<vmem>>, vector<8x128xf32>
    tpu.vector_store %arg6[%c0_6, %c0_7], %7 {strides = array<i32>} : memref<8x128xf32, #tpu.memory_space<vmem>>, vector<8x128xf32>,
    return
  }
  func.func @transform_0(%arg0: i32, %arg1: i32, %arg2: i32) -> (i32, i32) {
    %c0_i32 = arith.constant 0 : i32
    return %arg0, %arg2 : i32, i32
  }
  func.func @transform_1(%arg0: i32, %arg1: i32, %arg2: i32) -> (i32, i32) {
    %c0_i32 = arith.constant 0 : i32
    return %arg2, %arg1 : i32, i32
  }
  func.func @transform_2(%arg0: i32, %arg1: i32, %arg2: i32) -> (i32, i32) {
    %c0_i32 = arith.constant 0 : i32
    %c0_i32_0 = arith.constant 0 : i32
    return %c0_i32, %arg1 : i32, i32
  }
  func.func @transform_3(%arg0: i32, %arg1: i32, %arg2: i32) -> (i32, i32) {
    %c0_i32 = arith.constant 0 : i32
    return %arg0, %arg1 : i32, i32
  }
}

</mosaic_0001>

<llo_original>
// kernel: tpu_custom_call.1
$region0: #{tpu_custom_call.1}
  #allocation0 [shape = 'u32[]', space=smem, size = 0x4, offset = 0x4, fixed_abs, tag = 'smem constant byte address 0x4 - core index']
  #allocation1 [shape = 'u32[72,128]{1,0:T(1,128)}', space=vmem, size = 0x9000, scoped, tag = 'internal scratch']
  %s0 = inlined_call_operand.hbm [shape: f32[8,128], index: 0, kind: input, shape index: {}]
  %s1 = inlined_call_operand.hbm [shape: f32[128,128], index: 1, kind: input, shape index: {}]
  %s2 = inlined_call_operand.vmem [shape: f32[1,128], index: 2, kind: input, shape index: {}]
  %s3 = inlined_call_operand.hbm [shape: f32[8,128], index: 3, kind: output, shape index: {}]
  %s4 = sld [smem:[#allocation0]]
  $region34: #{tpu_custom_call.1} parent=0
    _
  %s6 = ssub.s32 1, %s4
  %s7 = scalar_select 0, %s6, %s4
  $region1: #{tpu_custom_call.1} parent=0
    #allocation2 [shape = 'u8[4096]{0}', space=vmem, size = 0x1000, scoped, tag = 'input window, operand 0, single buffered']
    #allocation3 [shape = 's32[1]{0}', space=sflag, size = 0x4, scoped, tag = 'scoped memory for tpu_custom_call.1']
    #allocation4 [shape = 's32[1]{0}', space=sflag, size = 0x4, scoped, tag = 'scoped memory for tpu_custom_call.1']
    #allocation5 [shape = 'u8[65536]{0}', space=vmem, size = 0x10000, scoped, tag = 'input window, operand 1, single buffered']
    #allocation6 [shape = 's32[1]{0}', space=sflag, size = 0x4, scoped, tag = 'scoped memory for tpu_custom_call.1']
    #allocation7 [shape = 'u8[4096]{0}', space=vmem, size = 0x1000, scoped, tag = 'output window, operand 0, single buffered']
    %8 = vsyncpa [#allocation3], 0
    %9 = vsyncpa [#allocation6], 0
    %10 = vsyncpa [#allocation4], 0
    // Predicated region
    $region2: #{tpu_custom_call.1} parent=1 // pred_check
      _
    $region3: #{tpu_custom_call.1} parent=1 // pred_check_branch
      %12 = sbr.rel (0) target = $region5
    $region4: #{tpu_custom_call.1} parent=1 // pred_region
      %14 = vsyncadd [#allocation3], 0
      %s16 = sshll.u32 %s0, 4
      %s17 = int_to_ptr.hbm [resolvable:$true] %s16
      %s18 = sshll.u32 [#allocation2], 4
      %s19 = int_to_ptr.vmem [resolvable:$true] %s18
      %21 = dma.hbm_to_vmem [thread:$0]  %s17, 128, %s19, [#allocation3]
    $region5: #{tpu_custom_call.1} parent=1 // pred_fallthru
      _
    // Predicated region
    $region6: #{tpu_custom_call.1} parent=1 // pred_check
      _
    $region7: #{tpu_custom_call.1} parent=1 // pred_check_branch
      %23 = sbr.rel (0) target = $region9
    $region8: #{tpu_custom_call.1} parent=1 // pred_region
      %25 = vsyncadd [#allocation6], 0
      %s26 = sshll.u32 %s1, 4
      %s27 = int_to_ptr.hbm [resolvable:$true] %s26
      %s28 = sshll.u32 [#allocation5], 4
      %s29 = int_to_ptr.vmem [resolvable:$true] %s28
      %34 = dma.hbm_to_vmem [thread:$0]  %s27, 2048, %s29, [#allocation6], 128, 128, 8
    $region9: #{tpu_custom_call.1} parent=1 // pred_fallthru
      _
    // Predicated region
    $region10: #{tpu_custom_call.1} parent=1 // pred_check
      _
    $region11: #{tpu_custom_call.1} parent=1 // pred_check_branch
      %36 = sbr.rel (0) target = $region13
    $region12: #{tpu_custom_call.1} parent=1 // pred_region
      _
    $region13: #{tpu_custom_call.1} parent=1 // pred_fallthru
      _
    // Predicated region
    $region14: #{tpu_custom_call.1} parent=1 // pred_check
      _
    $region15: #{tpu_custom_call.1} parent=1 // pred_check_branch
      %38 = sbr.rel (0) target = $region17
    $region16: #{tpu_custom_call.1} parent=1 // pred_region
      %40 = dma.done [#allocation3], 128
    $region17: #{tpu_custom_call.1} parent=1 // pred_fallthru
      _
    // Predicated region
    $region18: #{tpu_custom_call.1} parent=1 // pred_check
      _
    $region19: #{tpu_custom_call.1} parent=1 // pred_check_branch
      %42 = sbr.rel (0) target = $region21
    $region20: #{tpu_custom_call.1} parent=1 // pred_region
      %44 = dma.done [#allocation6], 2048
    $region21: #{tpu_custom_call.1} parent=1 // pred_fallthru
      _
    %p45 = scmp.eq.s32.totalorder 0, 0
    // Predicated region
    $region22: #{tpu_custom_call.1} parent=1 // pred_check
      %p46 = pneg %p45
    $region23: #{tpu_custom_call.1} parent=1 // pred_check_branch
      %48 = sbr.rel (%p46) target = $region25
    $region24: #{tpu_custom_call.1} parent=1 // pred_region
      %v49 = vld [vmem:[%s2] sm:$0x1]
      %v51 = vperm.slane %v49, 0
      %53 = vst [vmem:[#allocation7] sm:$0xff] %v51
    $region25: #{tpu_custom_call.1} parent=1 // pred_fallthru
      _
    %v54 = vld [vmem:[#allocation2] sm:$0xff]
    %v55 = vld [vmem:[#allocation5] sm:$0xff]
    %v56 = vld [vmem:[#allocation5 + $0x8] sm:$0xff]
    %v57 = vld [vmem:[#allocation5 + $0x10] sm:$0xff]
    %v58 = vld [vmem:[#allocation5 + $0x18] sm:$0xff]
    %v59 = vld [vmem:[#allocation5 + $0x20] sm:$0xff]
    %v60 = vld [vmem:[#allocation5 + $0x28] sm:$0xff]
    %v61 = vld [vmem:[#allocation5 + $0x30] sm:$0xff]
    %v62 = vld [vmem:[#allocation5 + $0x38] sm:$0xff]
    %v63 = vld [vmem:[#allocation5 + $0x40] sm:$0xff]
    %v64 = vld [vmem:[#allocation5 + $0x48] sm:$0xff]
    %v65 = vld [vmem:[#allocation5 + $0x50] sm:$0xff]
    %v66 = vld [vmem:[#allocation5 + $0x58] sm:$0xff]
    %v67 = vld [vmem:[#allocation5 + $0x60] sm:$0xff]
    %v68 = vld [vmem:[#allocation5 + $0x68] sm:$0xff]
    %v69 = vld [vmem:[#allocation5 + $0x70] sm:$0xff]
    %v70 = vld [vmem:[#allocation5 + $0x78] sm:$0xff]
    %71 = vmatpush.msra.mxu0 %v70
    %72 = vmatpush.msra.mxu0 %v69
    %73 = vmatpush.msra.mxu0 %v68
    %74 = vmatpush.msra.mxu0 %v67
    %75 = vmatpush.msra.mxu0 %v66
    %76 = vmatpush.msra.mxu0 %v65
    %77 = vmatpush.msra.mxu0 %v64
    %78 = vmatpush.msra.mxu0 %v63
    %79 = vmatpush.msra.mxu0 %v62
    %80 = vmatpush.msra.mxu0 %v61
    %81 = vmatpush.msra.mxu0 %v60
    %82 = vmatpush.msra.mxu0 %v59
    %83 = vmatpush.msra.mxu0 %v58
    %84 = vmatpush.msra.mxu0 %v57
    %85 = vmatpush.msra.mxu0 %v56
    %86 = vmatpush.msra.mxu0 %v55
    %87 = vmatmul.f32.gmra.mxu0 %v54
    %v88 = vpop.f32.mrf.mxu0
    %v89 = vadd.f32 0.0, %v88
    %90 = vdwg.mxu0
    %v91 = vld [vmem:[#allocation7] sm:$0xff]
    %v92 = vadd.f32 %v91, %v89
    %93 = vst [vmem:[#allocation7] sm:$0xff] %v92
    // Predicated region
    $region26: #{tpu_custom_call.1} parent=1 // pred_check
      _
    $region27: #{tpu_custom_call.1} parent=1 // pred_check_branch
      %95 = sbr.rel (0) target = $region29
    $region28: #{tpu_custom_call.1} parent=1 // pred_region
      %97 = vsyncadd [#allocation4], 0
      %s99 = sshll.u32 [#allocation7], 4
      %s100 = int_to_ptr.vmem [resolvable:$true] %s99
      %s101 = sshll.u32 %s3, 4
      %s102 = int_to_ptr.hbm [resolvable:$true] %s101
      %104 = dma.vmem_to_hbm [thread:$0]  %s100, 128, %s102, [#allocation4]
    $region29: #{tpu_custom_call.1} parent=1 // pred_fallthru
      _
    // Predicated region
    $region30: #{tpu_custom_call.1} parent=1 // pred_check
      _
    $region31: #{tpu_custom_call.1} parent=1 // pred_check_branch
      %106 = sbr.rel (0) target = $region33
    $region32: #{tpu_custom_call.1} parent=1 // pred_region
      %108 = dma.done [#allocation4], 128
    $region33: #{tpu_custom_call.1} parent=1 // pred_fallthru
      _
    %109 = vsyncpa [#allocation3], 1
    %110 = vsyncpa [#allocation6], 1
    %111 = vsyncpa [#allocation4], 1

</llo_original>
